<compile_context>
chip_gen: v7x
topology: tpu7x:2x2x1
jax: 0.10.0
libtpu: 0.0.40
codegen_flags: <defaults>
</compile_context>

<pallas_src>
import functools

import jax
import jax.numpy as jnp
from jax.experimental import pallas as pl
from jax.experimental.pallas import tpu as pltpu


def _round_up(x, m):
    return (x + m - 1) // m * m


def _critic_kernel(x_ref, wmat_ref, wvec_ref, out_ref, *, fin, hpad):
    """One batch tile of the critic forward pass.

    x_ref    : (TB, fin) f32, columns = [state | action | 1 | 0-pad]
    wmat_ref : (fin + 2*hpad, hpad) compute dtype, zero-padded packed rows:
                 [0:fin)             -> W1  (cat(state,action) -> input_out)
                 [fin:fin+hpad)      -> W2  (input_out -> layer1)
                 [fin+hpad:fin+2h)   -> W3  (layer1 -> layer2)
    wvec_ref : (8, hpad) f32 rows = b1, b2, b3, w4 (h3 lanes),
               w4 (|action| lanes of x, with b4 sitting on the ones lane)
    out_ref  : (1, TB) f32   (lane-dense output row)
    """
    x = x_ref[...]                                    # (TB, fin) f32
    cdt = wmat_ref.dtype                              # MXU operand dtype

    # Static, tile-aligned carve-outs of the packed parameter blob (zero cost:
    # fin is a multiple of 16, so slices stay aligned for f32 and bf16 packing).
    w1 = wmat_ref[0:fin, :]                           # (fin,  hpad)
    w2 = wmat_ref[fin:fin + hpad, :]                  # (hpad, hpad)
    w3 = wmat_ref[fin + hpad:fin + 2 * hpad, :]       # (hpad, hpad)

    b1 = wvec_ref[0:1, :]
    b2 = wvec_ref[1:2, :]
    b3 = wvec_ref[2:3, :]
    w4_h = wvec_ref[3:4, :]                           # head weights on h3 lanes
    w4_a = wvec_ref[4:5, 0:fin]                       # |action| weights (+ b4 on ones lane)

    # Layer 1: relu(Linear(cat(state, action)))  -- concat already done in wrapper.
    h1 = jnp.maximum(
        jnp.dot(x.astype(cdt), w1, preferred_element_type=jnp.float32) + b1, 0.0)
    # Layer 2: relu(Linear(h1))
    h2 = jnp.maximum(
        jnp.dot(h1.astype(cdt), w2, preferred_element_type=jnp.float32) + b2, 0.0)
    # Layer 3: relu(Linear(h2))
    h3 = jnp.maximum(
        jnp.dot(h2.astype(cdt), w3, preferred_element_type=jnp.float32) + b3, 0.0)

    # Head: Linear(cat(h3, |action|)), out_features = 1, no activation.
    # VPU multiply + XLU lane reductions; the state lanes of w4_a are zero and
    # the constant-1 lane of x carries b4.  (If a bundle dump ever shows the
    # 128-lane XLU reduce binding, move the h3 reduction onto the idle MXU as
    # an N=1 dot; at these sizes the kernel is per-step-overhead bound, so we
    # keep the simpler XLU form.)
    q = (jnp.sum(h3 * w4_h, axis=-1, keepdims=True)
         + jnp.sum(jnp.abs(x) * w4_a, axis=-1, keepdims=True))    # (TB, 1) f32

    # Lane-dense store: one small relayout of the (TB, 1) column into a
    # (1, TB) row, then a single unmasked vst per vreg.
    out_ref[...] = q.reshape(out_ref.shape).astype(out_ref.dtype)


def init_params(key, input_dims, action_dims, input_out, layer1_dims, layer2_dims):
    """torch.nn.Linear-style init: U[-1/sqrt(fan_in), 1/sqrt(fan_in)].
    Weights are stored pre-transposed as (in_features, out_features)."""
    def linear(k, fan_in, fan_out):
        kw, kb = jax.random.split(k)
        bound = 1.0 / (fan_in ** 0.5)
        w = jax.random.uniform(kw, (fan_in, fan_out), jnp.float32, -bound, bound)
        b = jax.random.uniform(kb, (fan_out,), jnp.float32, -bound, bound)
        return w, b

    k1, k2, k3, k4 = jax.random.split(key, 4)
    w1, b1 = linear(k1, input_dims + action_dims, input_out)
    w2, b2 = linear(k2, input_out, layer1_dims)
    w3, b3 = linear(k3, layer1_dims, layer2_dims)
    w4, b4 = linear(k4, layer2_dims + action_dims, 1)
    return dict(w1=w1, b1=b1, w2=w2, b2=b2, w3=w3, b3=b3, w4=w4, b4=b4)


def pack_params(raw, input_dims, action_dims, compute_dtype=jnp.bfloat16):
    """Pack all parameters into two kernel-friendly blobs (tile-aligned, zero padded).

    compute_dtype=jnp.bfloat16 is the recommended MXU operand dtype on all TPU
    generations (v5e/v6e/v7x); element-wise math stays f32 inside the kernel.
    """
    w1, w2, w3, w4 = raw["w1"], raw["w2"], raw["w3"], raw["w4"]
    b1, b2, b3, b4 = raw["b1"], raw["b2"], raw["b3"], raw["b4"]
    d1, d2, d3 = w1.shape[1], w2.shape[1], w3.shape[1]

    hpad = _round_up(max(d1, d2, d3, 128), 128)          # lane-padded hidden width
    fin = _round_up(input_dims + action_dims + 1, 16)    # +1 constant-one (bias) lane

    def pad2d(w, rows, cols):
        return jnp.zeros((rows, cols), jnp.float32).at[:w.shape[0], :w.shape[1]].set(w)

    wmat = jnp.concatenate(
        [pad2d(w1, fin, hpad), pad2d(w2, hpad, hpad), pad2d(w3, hpad, hpad)],
        axis=0).astype(compute_dtype)

    wvec = jnp.zeros((8, hpad), jnp.float32)
    wvec = wvec.at[0, :d1].set(b1)
    wvec = wvec.at[1, :d2].set(b2)
    wvec = wvec.at[2, :d3].set(b3)
    wvec = wvec.at[3, :d3].set(w4[:d3, 0])                                  # on h3 lanes
    wvec = wvec.at[4, input_dims:input_dims + action_dims].set(w4[d3:, 0])  # on |action| lanes
    wvec = wvec.at[4, input_dims + action_dims].set(b4[0])                  # b4 on the ones lane
    return dict(wmat=wmat, wvec=wvec, fin=fin, hpad=hpad,
                input_dims=input_dims, action_dims=action_dims)


def critic_forward(state, action, packed, *, block_b=256):
    """state: (B, input_dims) f32, action: (B, action_dims) f32, packed: pack_params()."""
    assert state.shape[0] == action.shape[0]
    assert block_b >= 8 and block_b % 8 == 0
    B = state.shape[0]
    in_dims, act_dims = state.shape[1], action.shape[1]
    # Guard against calling with shapes different from the ones baked into the packing.
    assert in_dims == packed["input_dims"] and act_dims == packed["action_dims"], (
        "state/action feature dims must match the dims used in pack_params()")
    fin, hpad = packed["fin"], packed["hpad"]
    wmat, wvec = packed["wmat"], packed["wvec"]
    wrows = wmat.shape[0]

    # ---- batch tiling ----
    # Small batches: one grid step (minimum per-step overhead, ~0.35 us each).
    # Tiled path: lane-dense (1, tb) output blocks require tb % 128 == 0; prefer
    # two even tiles when the batch fits in two (v7x megacore: one per TC).
    b8 = _round_up(B, 8)
    if b8 <= block_b:
        tb = b8
    else:
        tb = min(_round_up(block_b, 128), _round_up(pl.cdiv(b8, 2), 128))
    b_pad = _round_up(b8, tb)
    grid = (b_pad // tb,)

    # Build the padded LHS once: [state | action | 1 | 0-pad] -> (b_pad, fin).
    cols = [state.astype(jnp.float32), action.astype(jnp.float32),
            jnp.ones((B, 1), jnp.float32)]
    lane_pad = fin - (in_dims + act_dims + 1)
    if lane_pad:
        cols.append(jnp.zeros((B, lane_pad), jnp.float32))
    x = jnp.concatenate(cols, axis=1)
    if b_pad != B:
        x = jnp.pad(x, ((0, b_pad - B), (0, 0)))
    # TODO(synk): optionally pass state/action as separate inputs and do the
    # concat in-kernel to skip this HBM round-trip (modest win at fin=16 lanes).

    flops = 2 * b_pad * (fin * hpad + 2 * hpad * hpad + hpad + fin)
    bytes_accessed = (x.size * 4 + wmat.size * wmat.dtype.itemsize
                      + wvec.size * 4 + b_pad * 4)

    out = pl.pallas_call(
        functools.partial(_critic_kernel, fin=fin, hpad=hpad),
        out_shape=jax.ShapeDtypeStruct((1, b_pad), jnp.float32),   # lane-dense output
        grid_spec=pltpu.PrefetchScalarGridSpec(
            num_scalar_prefetch=0,
            grid=grid,
            in_specs=[
                pl.BlockSpec((tb, fin), lambda i: (i, 0)),        # batch tile (pipelined)
                pl.BlockSpec((wrows, hpad), lambda i: (0, 0)),    # weights: VMEM resident
                pl.BlockSpec((8, hpad), lambda i: (0, 0)),        # biases / head vectors
            ],
            out_specs=pl.BlockSpec((1, tb), lambda i: (0, i)),    # (1, tb) row per step
        ),
        compiler_params=pltpu.CompilerParams(
            dimension_semantics=("parallel",)),
        cost_estimate=pl.CostEstimate(
            flops=flops, transcendentals=0, bytes_accessed=bytes_accessed),
    )(x, wmat, wvec)
    # Padded rows carry garbage q values; slice them off before returning.
    return out.reshape(b_pad, 1)[:B]


def reference_forward(state, action, raw):
    """Pure-JAX reference mirroring the PyTorch module (full-precision matmuls)."""
    hi = jax.lax.Precision.HIGHEST
    x = jnp.concatenate([state, action], axis=1)
    h = jax.nn.relu(jnp.dot(x, raw["w1"], precision=hi) + raw["b1"])
    h = jax.nn.relu(jnp.dot(h, raw["w2"], precision=hi) + raw["b2"])
    h = jax.nn.relu(jnp.dot(h, raw["w3"], precision=hi) + raw["b3"])
    x4 = jnp.concatenate([h, jnp.abs(action)], axis=1)
    return jnp.dot(x4, raw["w4"], precision=hi) + raw["b4"]


if __name__ == "__main__":
    # Small shapes consistent with the module's constructor.
    input_dims, action_dims = 8, 4
    input_out, layer1_dims, layer2_dims = 32, 64, 32

    key = jax.random.PRNGKey(0)
    k_params, k_state, k_action, k_state2, k_action2 = jax.random.split(key, 5)

    raw = init_params(k_params, input_dims, action_dims,
                      input_out, layer1_dims, layer2_dims)

    packed_f32 = pack_params(raw, input_dims, action_dims, compute_dtype=jnp.float32)
    packed_bf16 = pack_params(raw, input_dims, action_dims)   # bf16 default (all gens)

    # --- Case 1: small RL-sized batch -> single grid step (grid=(1,)). ---
    B = 50
    state = jax.random.normal(k_state, (B, input_dims), jnp.float32)
    action = jax.random.normal(k_action, (B, action_dims), jnp.float32)
    ref = reference_forward(state, action, raw)

    out_f32 = jax.block_until_ready(critic_forward(state, action, packed_f32))
    assert out_f32.shape == (B, 1)
    assert jnp.allclose(out_f32, ref, atol=2e-3, rtol=2e-3), "f32 kernel mismatch vs reference"

    out_bf16 = jax.block_until_ready(critic_forward(state, action, packed_bf16))
    assert out_bf16.shape == (B, 1)
    assert jnp.allclose(out_bf16, ref, atol=3e-2, rtol=3e-2), "bf16 kernel mismatch vs reference"

    # --- Case 2: larger batch -> multi-step grid (exercises the tiled,
    # lane-dense-output path; block_b=128 gives 3 steps of 128 rows). ---
    B2 = 300
    state2 = jax.random.normal(k_state2, (B2, input_dims), jnp.float32)
    action2 = jax.random.normal(k_action2, (B2, action_dims), jnp.float32)
    ref2 = reference_forward(state2, action2, raw)
    out2 = jax.block_until_ready(
        critic_forward(state2, action2, packed_f32, block_b=128))
    assert out2.shape == (B2, 1)
    assert jnp.allclose(out2, ref2, atol=2e-3, rtol=2e-3), "tiled kernel mismatch vs reference"

    print("KERNEL_OK")
</pallas_src>

<mosaic_0001>
module attributes {stable_mosaic.version = 11 : i64} {
  func.func @_critic_kernel(%arg0: i32, %arg1: memref<56x16xf32, #tpu.memory_space<vmem>>, %arg2: memref<272x128xf32, #tpu.memory_space<vmem>>, %arg3: memref<8x128xf32, #tpu.memory_space<vmem>>, %arg4: memref<1x56xf32, #tpu.memory_space<vmem>>) attributes {dimension_semantics = [#tpu.dimension_semantics<parallel>], iteration_bounds = array<i64: 1>, scalar_prefetch = 0 : i64, scratch_operands = 0 : i64, tpu.core_type = #tpu.core_type<tc>, window_params = [{transform_indices = @transform_0, window_bounds = array<i64: 56, 16>}, {pipeline_mode = #tpu.pipeline_mode<synchronous>, transform_indices = @transform_1, window_bounds = array<i64: 272, 128>}, {pipeline_mode = #tpu.pipeline_mode<synchronous>, transform_indices = @transform_2, window_bounds = array<i64: 8, 128>}, {transform_indices = @transform_3, window_bounds = array<i64: 1, 56>}]} {
    %c0 = arith.constant 0 : index
    %c0_0 = arith.constant 0 : index
    %0 = vector.load %arg1[%c0, %c0_0] : memref<56x16xf32, #tpu.memory_space<vmem>>, vector<56x16xf32>
    %c0_1 = arith.constant 0 : index
    %c0_2 = arith.constant 0 : index
    %1 = vector.load %arg2[%c0_1, %c0_2] : memref<272x128xf32, #tpu.memory_space<vmem>>, vector<16x128xf32>
    %c16 = arith.constant 16 : index
    %c0_3 = arith.constant 0 : index
    %2 = vector.load %arg2[%c16, %c0_3] : memref<272x128xf32, #tpu.memory_space<vmem>>, vector<128x128xf32>
    %c144 = arith.constant 144 : index
    %c0_4 = arith.constant 0 : index
    %3 = vector.load %arg2[%c144, %c0_4] : memref<272x128xf32, #tpu.memory_space<vmem>>, vector<128x128xf32>
    %c0_5 = arith.constant 0 : index
    %c0_6 = arith.constant 0 : index
    %4 = vector.load %arg3[%c0_5, %c0_6] : memref<8x128xf32, #tpu.memory_space<vmem>>, vector<1x128xf32>
    %c1 = arith.constant 1 : index
    %c0_7 = arith.constant 0 : index
    %5 = vector.load %arg3[%c1, %c0_7] : memref<8x128xf32, #tpu.memory_space<vmem>>, vector<1x128xf32>
    %c2 = arith.constant 2 : index
    %c0_8 = arith.constant 0 : index
    %6 = vector.load %arg3[%c2, %c0_8] : memref<8x128xf32, #tpu.memory_space<vmem>>, vector<1x128xf32>
    %c3 = arith.constant 3 : index
    %c0_9 = arith.constant 0 : index
    %7 = vector.load %arg3[%c3, %c0_9] : memref<8x128xf32, #tpu.memory_space<vmem>>, vector<1x128xf32>
    %c4 = arith.constant 4 : index
    %c0_10 = arith.constant 0 : index
    %8 = vector.load %arg3[%c4, %c0_10] : memref<8x128xf32, #tpu.memory_space<vmem>>, vector<1x16xf32>
    %cst = arith.constant dense<0.000000e+00> : vector<56x128xf32>
    %9 = tpu.matmul %0, %1, %cst {dimension_numbers = #tpu.dot_dimension_numbers<[1], [0], [0], [1], [0, 0, 1, 1], [], []>} : vector<56x16xf32>, vector<16x128xf32>, vector<56x128xf32> -> vector<56x128xf32>
    %10 = vector.broadcast %4 : vector<1x128xf32> to vector<56x128xf32>
    %11 = arith.addf %9, %10 : vector<56x128xf32>
    %cst_11 = arith.constant 0.000000e+00 : f32
    %12 = vector.broadcast %cst_11 : f32 to vector<56x128xf32>
    %13 = arith.maximumf %11, %12 : vector<56x128xf32>
    %cst_12 = arith.constant dense<0.000000e+00> : vector<56x128xf32>
    %14 = tpu.matmul %13, %2, %cst_12 {dimension_numbers = #tpu.dot_dimension_numbers<[1], [0], [0], [1], [0, 0, 1, 1], [], []>} : vector<56x128xf32>, vector<128x128xf32>, vector<56x128xf32> -> vector<56x128xf32>
    %15 = vector.broadcast %5 : vector<1x128xf32> to vector<56x128xf32>
    %16 = arith.addf %14, %15 : vector<56x128xf32>
    %cst_13 = arith.constant 0.000000e+00 : f32
    %17 = vector.broadcast %cst_13 : f32 to vector<56x128xf32>
    %18 = arith.maximumf %16, %17 : vector<56x128xf32>
    %cst_14 = arith.constant dense<0.000000e+00> : vector<56x128xf32>
    %19 = tpu.matmul %18, %3, %cst_14 {dimension_numbers = #tpu.dot_dimension_numbers<[1], [0], [0], [1], [0, 0, 1, 1], [], []>} : vector<56x128xf32>, vector<128x128xf32>, vector<56x128xf32> -> vector<56x128xf32>
    %20 = vector.broadcast %6 : vector<1x128xf32> to vector<56x128xf32>
    %21 = arith.addf %19, %20 : vector<56x128xf32>
    %cst_15 = arith.constant 0.000000e+00 : f32
    %22 = vector.broadcast %cst_15 : f32 to vector<56x128xf32>
    %23 = arith.maximumf %21, %22 : vector<56x128xf32>
    %24 = vector.broadcast %7 : vector<1x128xf32> to vector<56x128xf32>
    %25 = arith.mulf %23, %24 : vector<56x128xf32>
    %cst_16 = arith.constant dense<0.000000e+00> : vector<56xf32>
    %26 = vector.multi_reduction <add>, %25, %cst_16 [1] : vector<56x128xf32> to vector<56xf32>
    %27 = vector.shape_cast %26 : vector<56xf32> to vector<56x1xf32>
    %28 = math.absf %0 : vector<56x16xf32>
    %29 = vector.broadcast %8 : vector<1x16xf32> to vector<56x16xf32>
    %30 = arith.mulf %28, %29 : vector<56x16xf32>
    %cst_17 = arith.constant dense<0.000000e+00> : vector<56xf32>
    %31 = vector.multi_reduction <add>, %30, %cst_17 [1] : vector<56x16xf32> to vector<56xf32>
    %32 = vector.shape_cast %31 : vector<56xf32> to vector<56x1xf32>
    %33 = arith.addf %27, %32 : vector<56x1xf32>
    %34 = vector.shape_cast %33 : vector<56x1xf32> to vector<1x56xf32>
    %c0_18 = arith.constant 0 : index
    %c0_19 = arith.constant 0 : index
    %35 = vector.load %arg4[%c0_18, %c0_19] : memref<1x56xf32, #tpu.memory_space<vmem>>, vector<1x56xf32>
    tpu.vector_store %arg4[%c0_18, %c0_19], %34 {strides = array<i32>} : memref<1x56xf32, #tpu.memory_space<vmem>>, vector<1x56xf32>,
    return
  }
  func.func @transform_0(%arg0: i32) -> (i32, i32) {
    %c0_i32 = arith.constant 0 : i32
    %c0_i32_0 = arith.constant 0 : i32
    return %arg0, %c0_i32 : i32, i32
  }
  func.func @transform_1(%arg0: i32) -> (i32, i32) {
    %c0_i32 = arith.constant 0 : i32
    %c0_i32_0 = arith.constant 0 : i32
    %c0_i32_1 = arith.constant 0 : i32
    return %c0_i32, %c0_i32_0 : i32, i32
  }
  func.func @transform_2(%arg0: i32) -> (i32, i32) {
    %c0_i32 = arith.constant 0 : i32
    %c0_i32_0 = arith.constant 0 : i32
    %c0_i32_1 = arith.constant 0 : i32
    return %c0_i32, %c0_i32_0 : i32, i32
  }
  func.func @transform_3(%arg0: i32) -> (i32, i32) {
    %c0_i32 = arith.constant 0 : i32
    %c0_i32_0 = arith.constant 0 : i32
    return %c0_i32, %arg0 : i32, i32
  }
}

</mosaic_0001>

<llo_original>
// kernel: tpu_custom_call.1
$region0: #{tpu_custom_call.1}
  #allocation0 [shape = 'u32[]', space=smem, size = 0x4, offset = 0x4, fixed_abs, tag = 'smem constant byte address 0x4 - core index']
  #allocation1 [shape = 'u32[144,128]{1,0:T(1,128)}', space=vmem, size = 0x12000, scoped, tag = 'internal scratch']
  %s0 = inlined_call_operand.vmem [shape: f32[56,16], index: 0, kind: input, shape index: {}]
  %s1 = inlined_call_operand.hbm [shape: f32[272,128], index: 1, kind: input, shape index: {}]
  %s2 = inlined_call_operand.vmem [shape: f32[8,128], index: 2, kind: input, shape index: {}]
  %s3 = inlined_call_operand.hbm [shape: f32[1,56], index: 3, kind: output, shape index: {}]
  %s4 = sld [smem:[#allocation0]]
  $region26: #{tpu_custom_call.1} parent=0
    _
  %s6 = ssub.s32 1, %s4
  %s7 = scalar_select 0, %s6, %s4
  $region1: #{tpu_custom_call.1} parent=0
    #allocation2 [shape = 'u8[139264]{0}', space=vmem, size = 0x22000, scoped, tag = 'input window, operand 1, single buffered']
    #allocation3 [shape = 's32[1]{0}', space=sflag, size = 0x4, scoped, tag = 'scoped memory for tpu_custom_call.1']
    #allocation4 [shape = 's32[1]{0}', space=sflag, size = 0x4, scoped, tag = 'scoped memory for tpu_custom_call.1']
    #allocation5 [shape = 'u8[512]{0}', space=vmem, size = 0x400, scoped, tag = 'output window, operand 0, single buffered']
    %8 = vsyncpa [#allocation3], 0
    %9 = vsyncpa [#allocation4], 0
    // Predicated region
    $region2: #{tpu_custom_call.1} parent=1 // pred_check
      _
    $region3: #{tpu_custom_call.1} parent=1 // pred_check_branch
      %11 = sbr.rel (0) target = $region5
    $region4: #{tpu_custom_call.1} parent=1 // pred_region
      _
    $region5: #{tpu_custom_call.1} parent=1 // pred_fallthru
      _
    // Predicated region
    $region6: #{tpu_custom_call.1} parent=1 // pred_check
      _
    $region7: #{tpu_custom_call.1} parent=1 // pred_check_branch
      %13 = sbr.rel (0) target = $region9
    $region8: #{tpu_custom_call.1} parent=1 // pred_region
      %s15 = ssub.s32 4352, 4352
      %16 = vsyncadd [#allocation3], %s15
      %s17 = sshll.u32 [#allocation2], 4
      %s18 = int_to_ptr.vmem [resolvable:$true] %s17
      %23 = dma.hbm_to_vmem [thread:$0]  %s1, 4352, %s18, [#allocation3], 128, 128, 8
    $region9: #{tpu_custom_call.1} parent=1 // pred_fallthru
      _
    // Predicated region
    $region10: #{tpu_custom_call.1} parent=1 // pred_check
      _
    $region11: #{tpu_custom_call.1} parent=1 // pred_check_branch
      %25 = sbr.rel (0) target = $region13
    $region12: #{tpu_custom_call.1} parent=1 // pred_region
      _
    $region13: #{tpu_custom_call.1} parent=1 // pred_fallthru
      _
    // Predicated region
    $region14: #{tpu_custom_call.1} parent=1 // pred_check
      _
    $region15: #{tpu_custom_call.1} parent=1 // pred_check_branch
      %27 = sbr.rel (0) target = $region17
    $region16: #{tpu_custom_call.1} parent=1 // pred_region
      %28 = dma.done [#allocation3], 4352
    $region17: #{tpu_custom_call.1} parent=1 // pred_fallthru
      _
    %v29 = vld [vmem:[%s0] sm:$0xff]
    %v30 = vld [vmem:[%s0 + $0x8] sm:$0xff]
    %v31 = vld [vmem:[%s0 + $0x10] sm:$0xff]
    %v32 = vld [vmem:[%s0 + $0x18] sm:$0xff]
    %v33 = vld [vmem:[%s0 + $0x20] sm:$0xff]
    %v34 = vld [vmem:[%s0 + $0x28] sm:$0xff]
    %v35 = vld [vmem:[%s0 + $0x30] sm:$0xff]
    %v36 = vld [vmem:[#allocation2] sm:$0xff]
    %v37 = vld [vmem:[#allocation2 + $0x8] sm:$0xff]
    %v38 = vld [vmem:[#allocation2 + $0x10] sm:$0xff]
    %v39 = vld [vmem:[#allocation2 + $0x18] sm:$0xff]
    %v40 = vld [vmem:[#allocation2 + $0x20] sm:$0xff]
    %v41 = vld [vmem:[#allocation2 + $0x28] sm:$0xff]
    %v42 = vld [vmem:[#allocation2 + $0x30] sm:$0xff]
    %v43 = vld [vmem:[#allocation2 + $0x38] sm:$0xff]
    %v44 = vld [vmem:[#allocation2 + $0x40] sm:$0xff]
    %v45 = vld [vmem:[#allocation2 + $0x48] sm:$0xff]
    %v46 = vld [vmem:[#allocation2 + $0x50] sm:$0xff]
    %v47 = vld [vmem:[#allocation2 + $0x58] sm:$0xff]
    %v48 = vld [vmem:[#allocation2 + $0x60] sm:$0xff]
    %v49 = vld [vmem:[#allocation2 + $0x68] sm:$0xff]
    %v50 = vld [vmem:[#allocation2 + $0x70] sm:$0xff]
    %v51 = vld [vmem:[#allocation2 + $0x78] sm:$0xff]
    %v52 = vld [vmem:[#allocation2 + $0x80] sm:$0xff]
    %v53 = vld [vmem:[#allocation2 + $0x88] sm:$0xff]
    %v54 = vld [vmem:[#allocation2 + $0x90] sm:$0xff]
    %v55 = vld [vmem:[#allocation2 + $0x98] sm:$0xff]
    %v56 = vld [vmem:[#allocation2 + $0xa0] sm:$0xff]
    %v57 = vld [vmem:[#allocation2 + $0xa8] sm:$0xff]
    %v58 = vld [vmem:[#allocation2 + $0xb0] sm:$0xff]
    %v59 = vld [vmem:[#allocation2 + $0xb8] sm:$0xff]
    %v60 = vld [vmem:[#allocation2 + $0xc0] sm:$0xff]
    %v61 = vld [vmem:[#allocation2 + $0xc8] sm:$0xff]
    %v62 = vld [vmem:[#allocation2 + $0xd0] sm:$0xff]
    %v63 = vld [vmem:[#allocation2 + $0xd8] sm:$0xff]
    %v64 = vld [vmem:[#allocation2 + $0xe0] sm:$0xff]
    %v65 = vld [vmem:[#allocation2 + $0xe8] sm:$0xff]
    %v66 = vld [vmem:[#allocation2 + $0xf0] sm:$0xff]
    %v67 = vld [vmem:[#allocation2 + $0xf8] sm:$0xff]
    %v68 = vld [vmem:[#allocation2 + $0x100] sm:$0xff]
    %v69 = vld [vmem:[#allocation2 + $0x108] sm:$0xff]
    %v70 = vld [vmem:[%s2] sm:$0x1]
    %v71 = vld [vmem:[%s2 + $0x1] sm:$0x1]
    %v72 = vld [vmem:[%s2 + $0x2] sm:$0x1]
    %v73 = vld [vmem:[%s2 + $0x3] sm:$0x1]
    %v74 = vld [vmem:[%s2 + $0x4] sm:$0x1]
    %v75 = vlaneseq
    %v76 = vshrl.u32 %v75, 7
    %v77 = vsub.s32 0, %v76
    %v78 = vrot.slane %v70, %v77
    %vm79 = vcmask 130048
    %v81 = vsel %vm79, %v29, 0
    %v84 = vsel %vm79, %v30, 0
    %v87 = vsel %vm79, %v31, 0
    %v90 = vsel %vm79, %v32, 0
    %v93 = vsel %vm79, %v33, 0
    %v96 = vsel %vm79, %v34, 0
    %v99 = vsel %vm79, %v35, 0
    %101 = vmatprep.subr.mxu0 0.0
    %102 = vmatpush1.msra.mxu0 %v36
    %103 = vmatprep.subr.mxu0 0.0
    %104 = vmatpush1.msra.mxu0 %v37
    %105 = vmatprep.subr.mxu0 0.0
    %106 = vmatpush1.msra.mxu0 0.0
    %107 = vmatprep.subr.mxu0 0.0
    %108 = vmatpush1.msra.mxu0 0.0
    %109 = vmatprep.subr.mxu0 0.0
    %110 = vmatpush1.msra.mxu0 0.0
    %111 = vmatprep.subr.mxu0 0.0
    %112 = vmatpush1.msra.mxu0 0.0
    %113 = vmatprep.subr.mxu0 0.0
    %114 = vmatpush1.msra.mxu0 0.0
    %115 = vmatprep.subr.mxu0 0.0
    %116 = vmatpush1.msra.mxu0 0.0
    %117 = vmatprep.subr.mxu0 0.0
    %118 = vmatpush1.msra.mxu0 0.0
    %119 = vmatprep.subr.mxu0 0.0
    %120 = vmatpush1.msra.mxu0 0.0
    %121 = vmatprep.subr.mxu0 0.0
    %122 = vmatpush1.msra.mxu0 0.0
    %123 = vmatprep.subr.mxu0 0.0
    %124 = vmatpush1.msra.mxu0 0.0
    %125 = vmatprep.subr.mxu0 0.0
    %126 = vmatpush1.msra.mxu0 0.0
    %127 = vmatprep.subr.mxu0 0.0
    %128 = vmatpush1.msra.mxu0 0.0
    %129 = vmatprep.subr.mxu0 0.0
    %130 = vmatpush1.msra.mxu0 0.0
    %131 = vmatprep.subr.mxu0 0.0
    %132 = vmatpush1.msra.mxu0 0.0
    %133 = vmatprep.subr.mxu0 0.0
    %134 = vmatpush1.msra.mxu0 0.0
    %135 = vmatprep.subr.mxu0 0.0
    %136 = vmatpush1.msra.mxu0 0.0
    %137 = vmatprep.subr.mxu0 0.0
    %138 = vmatpush1.msra.mxu0 0.0
    %139 = vmatprep.subr.mxu0 0.0
    %140 = vmatpush1.msra.mxu0 0.0
    %141 = vmatprep.subr.mxu0 0.0
    %142 = vmatpush1.msra.mxu0 0.0
    %143 = vmatprep.subr.mxu0 0.0
    %144 = vmatpush1.msra.mxu0 0.0
    %145 = vmatprep.subr.mxu0 0.0
    %146 = vmatpush1.msra.mxu0 0.0
    %147 = vmatprep.subr.mxu0 0.0
    %148 = vmatpush1.msra.mxu0 0.0
    %149 = vmatprep.subr.mxu0 0.0
    %150 = vmatpush1.msra.mxu0 0.0
    %151 = vmatprep.subr.mxu0 0.0
    %152 = vmatpush1.msra.mxu0 0.0
    %153 = vmatprep.subr.mxu0 0.0
    %154 = vmatpush1.msra.mxu0 0.0
    %155 = vmatprep.subr.mxu0 0.0
    %156 = vmatpush1.msra.mxu0 0.0
    %157 = vmatprep.subr.mxu0 0.0
    %158 = vmatpush1.msra.mxu0 0.0
    %159 = vmatprep.subr.mxu0 0.0
    %160 = vmatpush1.msra.mxu0 0.0
    %161 = vmatprep.subr.mxu0 0.0
    %162 = vmatpush1.msra.mxu0 0.0
    %163 = vmatprep.subr.mxu0 0.0
    %164 = vmatpush1.msra.mxu0 0.0
    %165 = vmatprep.mubr.f32.mxu0 0.0
    %166 = vmatmul.mubr.f32.gmra.mrb[0].mxu0 %v81
    %v167 = vpop.f32.mrb[0].mxu0
    %v168 = vadd.f32 %v78, %v167
    %v169 = vpop.f32.mrb[0].mxu0
    %170 = vmatprep.mubr.f32.mxu0 0.0
    %171 = vmatmul.mubr.f32.gmra.mrb[0].mxu0 %v84
    %v172 = vpop.f32.mrb[0].mxu0
    %v173 = vadd.f32 %v78, %v172
    %v174 = vpop.f32.mrb[0].mxu0
    %175 = vmatprep.mubr.f32.mxu0 0.0
    %176 = vmatmul.mubr.f32.gmra.mrb[0].mxu0 %v87
    %v177 = vpop.f32.mrb[0].mxu0
    %v178 = vadd.f32 %v78, %v177
    %v179 = vpop.f32.mrb[0].mxu0
    %180 = vmatprep.mubr.f32.mxu0 0.0
    %181 = vmatmul.mubr.f32.gmra.mrb[0].mxu0 %v90
    %v182 = vpop.f32.mrb[0].mxu0
    %v183 = vadd.f32 %v78, %v182
    %v184 = vpop.f32.mrb[0].mxu0
    %185 = vmatprep.mubr.f32.mxu0 0.0
    %186 = vmatmul.mubr.f32.gmra.mrb[0].mxu0 %v93
    %v187 = vpop.f32.mrb[0].mxu0
    %v188 = vadd.f32 %v78, %v187
    %v189 = vpop.f32.mrb[0].mxu0
    %190 = vmatprep.mubr.f32.mxu0 0.0
    %191 = vmatmul.mubr.f32.gmra.mrb[0].mxu0 %v96
    %v192 = vpop.f32.mrb[0].mxu0
    %v193 = vadd.f32 %v78, %v192
    %v194 = vpop.f32.mrb[0].mxu0
    %195 = vmatprep.mubr.f32.mxu0 0.0
    %196 = vmatmul.mubr.f32.gmra.mrb[0].mxu0 %v99
    %v197 = vpop.f32.mrb[0].mxu0
    %v198 = vadd.f32 %v78, %v197
    %v199 = vpop.f32.mrb[0].mxu0
    %200 = vdwg.mxu0
    %v201 = vmax.f32 %v168, 0.0
    %v202 = vmax.f32 %v173, 0.0
    %v203 = vmax.f32 %v178, 0.0
    %v204 = vmax.f32 %v183, 0.0
    %v205 = vmax.f32 %v188, 0.0
    %v206 = vmax.f32 %v193, 0.0
    %v207 = vmax.f32 %v198, 0.0
    %v208 = vlaneseq
    %v209 = vshrl.u32 %v208, 7
    %v210 = vsub.s32 0, %v209
    %v211 = vrot.slane %v71, %v210
    %212 = vmatprep.subr.mxu0 0.0
    %213 = vmatpush1.msra.mxu0 %v38
    %214 = vmatprep.subr.mxu0 0.0
    %215 = vmatpush1.msra.mxu0 %v39
    %216 = vmatprep.subr.mxu0 0.0
    %217 = vmatpush1.msra.mxu0 %v40
    %218 = vmatprep.subr.mxu0 0.0
    %219 = vmatpush1.msra.mxu0 %v41
    %220 = vmatprep.subr.mxu0 0.0
    %221 = vmatpush1.msra.mxu0 %v42
    %222 = vmatprep.subr.mxu0 0.0
    %223 = vmatpush1.msra.mxu0 %v43
    %224 = vmatprep.subr.mxu0 0.0
    %225 = vmatpush1.msra.mxu0 %v44
    %226 = vmatprep.subr.mxu0 0.0
    %227 = vmatpush1.msra.mxu0 %v45
    %228 = vmatprep.subr.mxu0 0.0
    %229 = vmatpush1.msra.mxu0 %v46
    %230 = vmatprep.subr.mxu0 0.0
    %231 = vmatpush1.msra.mxu0 %v47
    %232 = vmatprep.subr.mxu0 0.0
    %233 = vmatpush1.msra.mxu0 %v48
    %234 = vmatprep.subr.mxu0 0.0
    %235 = vmatpush1.msra.mxu0 %v49
    %236 = vmatprep.subr.mxu0 0.0
    %237 = vmatpush1.msra.mxu0 %v50
    %238 = vmatprep.subr.mxu0 0.0
    %239 = vmatpush1.msra.mxu0 %v51
    %240 = vmatprep.subr.mxu0 0.0
    %241 = vmatpush1.msra.mxu0 %v52
    %242 = vmatprep.subr.mxu0 0.0
    %243 = vmatpush1.msra.mxu0 %v53
    %244 = vmatprep.subr.mxu0 0.0
    %245 = vmatpush1.msra.mxu0 0.0
    %246 = vmatprep.subr.mxu0 0.0
    %247 = vmatpush1.msra.mxu0 0.0
    %248 = vmatprep.subr.mxu0 0.0
    %249 = vmatpush1.msra.mxu0 0.0
    %250 = vmatprep.subr.mxu0 0.0
    %251 = vmatpush1.msra.mxu0 0.0
    %252 = vmatprep.subr.mxu0 0.0
    %253 = vmatpush1.msra.mxu0 0.0
    %254 = vmatprep.subr.mxu0 0.0
    %255 = vmatpush1.msra.mxu0 0.0
    %256 = vmatprep.subr.mxu0 0.0
    %257 = vmatpush1.msra.mxu0 0.0
    %258 = vmatprep.subr.mxu0 0.0
    %259 = vmatpush1.msra.mxu0 0.0
    %260 = vmatprep.subr.mxu0 0.0
    %261 = vmatpush1.msra.mxu0 0.0
    %262 = vmatprep.subr.mxu0 0.0
    %263 = vmatpush1.msra.mxu0 0.0
    %264 = vmatprep.subr.mxu0 0.0
    %265 = vmatpush1.msra.mxu0 0.0
    %266 = vmatprep.subr.mxu0 0.0
    %267 = vmatpush1.msra.mxu0 0.0
    %268 = vmatprep.subr.mxu0 0.0
    %269 = vmatpush1.msra.mxu0 0.0
    %270 = vmatprep.subr.mxu0 0.0
    %271 = vmatpush1.msra.mxu0 0.0
    %272 = vmatprep.subr.mxu0 0.0
    %273 = vmatpush1.msra.mxu0 0.0
    %274 = vmatprep.subr.mxu0 0.0
    %275 = vmatpush1.msra.mxu0 0.0
    %276 = vmatprep.mubr.f32.mxu0 0.0
    %277 = vmatmul.mubr.f32.gmra.mrb[0].mxu0 %v201
    %v278 = vpop.f32.mrb[0].mxu0
    %v279 = vadd.f32 %v211, %v278
    %v280 = vpop.f32.mrb[0].mxu0
    %281 = vmatprep.mubr.f32.mxu0 0.0
    %282 = vmatmul.mubr.f32.gmra.mrb[0].mxu0 %v202
    %v283 = vpop.f32.mrb[0].mxu0
    %v284 = vadd.f32 %v211, %v283
    %v285 = vpop.f32.mrb[0].mxu0
    %286 = vmatprep.mubr.f32.mxu0 0.0
    %287 = vmatmul.mubr.f32.gmra.mrb[0].mxu0 %v203
    %v288 = vpop.f32.mrb[0].mxu0
    %v289 = vadd.f32 %v211, %v288
    %v290 = vpop.f32.mrb[0].mxu0
    %291 = vmatprep.mubr.f32.mxu0 0.0
    %292 = vmatmul.mubr.f32.gmra.mrb[0].mxu0 %v204
    %v293 = vpop.f32.mrb[0].mxu0
    %v294 = vadd.f32 %v211, %v293
    %v295 = vpop.f32.mrb[0].mxu0
    %296 = vmatprep.mubr.f32.mxu0 0.0
    %297 = vmatmul.mubr.f32.gmra.mrb[0].mxu0 %v205
    %v298 = vpop.f32.mrb[0].mxu0
    %v299 = vadd.f32 %v211, %v298
    %v300 = vpop.f32.mrb[0].mxu0
    %301 = vmatprep.mubr.f32.mxu0 0.0
    %302 = vmatmul.mubr.f32.gmra.mrb[0].mxu0 %v206
    %v303 = vpop.f32.mrb[0].mxu0
    %v304 = vadd.f32 %v211, %v303
    %v305 = vpop.f32.mrb[0].mxu0
    %306 = vmatprep.mubr.f32.mxu0 0.0
    %307 = vmatmul.mubr.f32.gmra.mrb[0].mxu0 %v207
    %v308 = vpop.f32.mrb[0].mxu0
    %v309 = vadd.f32 %v211, %v308
    %v310 = vpop.f32.mrb[0].mxu0
    %311 = vdwg.mxu0
    %v312 = vmax.f32 %v279, 0.0
    %v313 = vmax.f32 %v284, 0.0
    %v314 = vmax.f32 %v289, 0.0
    %v315 = vmax.f32 %v294, 0.0
    %v316 = vmax.f32 %v299, 0.0
    %v317 = vmax.f32 %v304, 0.0
    %v318 = vmax.f32 %v309, 0.0
    %v319 = vlaneseq
    %v320 = vshrl.u32 %v319, 7
    %v321 = vsub.s32 0, %v320
    %v322 = vrot.slane %v72, %v321
    %323 = vmatprep.subr.mxu0 0.0
    %324 = vmatpush1.msra.mxu0 %v54
    %325 = vmatprep.subr.mxu0 0.0
    %326 = vmatpush1.msra.mxu0 %v55
    %327 = vmatprep.subr.mxu0 0.0
    %328 = vmatpush1.msra.mxu0 %v56
    %329 = vmatprep.subr.mxu0 0.0
    %330 = vmatpush1.msra.mxu0 %v57
    %331 = vmatprep.subr.mxu0 0.0
    %332 = vmatpush1.msra.mxu0 %v58
    %333 = vmatprep.subr.mxu0 0.0
    %334 = vmatpush1.msra.mxu0 %v59
    %335 = vmatprep.subr.mxu0 0.0
    %336 = vmatpush1.msra.mxu0 %v60
    %337 = vmatprep.subr.mxu0 0.0
    %338 = vmatpush1.msra.mxu0 %v61
    %339 = vmatprep.subr.mxu0 0.0
    %340 = vmatpush1.msra.mxu0 %v62
    %341 = vmatprep.subr.mxu0 0.0
    %342 = vmatpush1.msra.mxu0 %v63
    %343 = vmatprep.subr.mxu0 0.0
    %344 = vmatpush1.msra.mxu0 %v64
    %345 = vmatprep.subr.mxu0 0.0
    %346 = vmatpush1.msra.mxu0 %v65
    %347 = vmatprep.subr.mxu0 0.0
    %348 = vmatpush1.msra.mxu0 %v66
    %349 = vmatprep.subr.mxu0 0.0
    %350 = vmatpush1.msra.mxu0 %v67
    %351 = vmatprep.subr.mxu0 0.0
    %352 = vmatpush1.msra.mxu0 %v68
    %353 = vmatprep.subr.mxu0 0.0
    %354 = vmatpush1.msra.mxu0 %v69
    %355 = vmatprep.subr.mxu0 0.0
    %356 = vmatpush1.msra.mxu0 0.0
    %357 = vmatprep.subr.mxu0 0.0
    %358 = vmatpush1.msra.mxu0 0.0
    %359 = vmatprep.subr.mxu0 0.0
    %360 = vmatpush1.msra.mxu0 0.0
    %361 = vmatprep.subr.mxu0 0.0
    %362 = vmatpush1.msra.mxu0 0.0
    %363 = vmatprep.subr.mxu0 0.0
    %364 = vmatpush1.msra.mxu0 0.0
    %365 = vmatprep.subr.mxu0 0.0
    %366 = vmatpush1.msra.mxu0 0.0
    %367 = vmatprep.subr.mxu0 0.0
    %368 = vmatpush1.msra.mxu0 0.0
    %369 = vmatprep.subr.mxu0 0.0
    %370 = vmatpush1.msra.mxu0 0.0
    %371 = vmatprep.subr.mxu0 0.0
    %372 = vmatpush1.msra.mxu0 0.0
    %373 = vmatprep.subr.mxu0 0.0
    %374 = vmatpush1.msra.mxu0 0.0
    %375 = vmatprep.subr.mxu0 0.0
    %376 = vmatpush1.msra.mxu0 0.0
    %377 = vmatprep.subr.mxu0 0.0
    %378 = vmatpush1.msra.mxu0 0.0
    %379 = vmatprep.subr.mxu0 0.0
    %380 = vmatpush1.msra.mxu0 0.0
    %381 = vmatprep.subr.mxu0 0.0
    %382 = vmatpush1.msra.mxu0 0.0
    %383 = vmatprep.subr.mxu0 0.0
    %384 = vmatpush1.msra.mxu0 0.0
    %385 = vmatprep.subr.mxu0 0.0
    %386 = vmatpush1.msra.mxu0 0.0
    %387 = vmatprep.mubr.f32.mxu0 0.0
    %388 = vmatmul.mubr.f32.gmra.mrb[0].mxu0 %v312
    %v389 = vpop.f32.mrb[0].mxu0
    %v390 = vadd.f32 %v322, %v389
    %v391 = vpop.f32.mrb[0].mxu0
    %392 = vmatprep.mubr.f32.mxu0 0.0
    %393 = vmatmul.mubr.f32.gmra.mrb[0].mxu0 %v313
    %v394 = vpop.f32.mrb[0].mxu0
    %v395 = vadd.f32 %v322, %v394
    %v396 = vpop.f32.mrb[0].mxu0
    %397 = vmatprep.mubr.f32.mxu0 0.0
    %398 = vmatmul.mubr.f32.gmra.mrb[0].mxu0 %v314
    %v399 = vpop.f32.mrb[0].mxu0
    %v400 = vadd.f32 %v322, %v399
    %v401 = vpop.f32.mrb[0].mxu0
    %402 = vmatprep.mubr.f32.mxu0 0.0
    %403 = vmatmul.mubr.f32.gmra.mrb[0].mxu0 %v315
    %v404 = vpop.f32.mrb[0].mxu0
    %v405 = vadd.f32 %v322, %v404
    %v406 = vpop.f32.mrb[0].mxu0
    %407 = vmatprep.mubr.f32.mxu0 0.0
    %408 = vmatmul.mubr.f32.gmra.mrb[0].mxu0 %v316
    %v409 = vpop.f32.mrb[0].mxu0
    %v410 = vadd.f32 %v322, %v409
    %v411 = vpop.f32.mrb[0].mxu0
    %412 = vmatprep.mubr.f32.mxu0 0.0
    %413 = vmatmul.mubr.f32.gmra.mrb[0].mxu0 %v317
    %v414 = vpop.f32.mrb[0].mxu0
    %v415 = vadd.f32 %v322, %v414
    %v416 = vpop.f32.mrb[0].mxu0
    %417 = vmatprep.mubr.f32.mxu0 0.0
    %418 = vmatmul.mubr.f32.gmra.mrb[0].mxu0 %v318
    %v419 = vpop.f32.mrb[0].mxu0
    %v420 = vadd.f32 %v322, %v419
    %v421 = vpop.f32.mrb[0].mxu0
    %422 = vdwg.mxu0
    %v423 = vmax.f32 %v390, 0.0
    %v424 = vmax.f32 %v395, 0.0
    %v425 = vmax.f32 %v400, 0.0
    %v426 = vmax.f32 %v405, 0.0
    %v427 = vmax.f32 %v410, 0.0
    %v428 = vmax.f32 %v415, 0.0
    %v429 = vmax.f32 %v420, 0.0
    %v430 = vlaneseq
    %v431 = vshrl.u32 %v430, 7
    %v432 = vsub.s32 0, %v431
    %v433 = vrot.slane %v73, %v432
    %v434 = vmul.f32 %v423, %v433
    %v435 = vmul.f32 %v424, %v433
    %v436 = vmul.f32 %v425, %v433
    %v437 = vmul.f32 %v426, %v433
    %v438 = vmul.f32 %v427, %v433
    %v439 = vmul.f32 %v428, %v433
    %v440 = vmul.f32 %v429, %v433
    %441 = vadd.xlane.f32.xlu0 %v434
    %v442 = vpop.xlane.xlu0 %441
    %443 = vadd.xlane.f32.xlu0 %v435
    %v444 = vpop.xlane.xlu0 %443
    %445 = vadd.xlane.f32.xlu0 %v436
    %v446 = vpop.xlane.xlu0 %445
    %447 = vadd.xlane.f32.xlu0 %v437
    %v448 = vpop.xlane.xlu0 %447
    %449 = vadd.xlane.f32.xlu0 %v438
    %v450 = vpop.xlane.xlu0 %449
    %451 = vadd.xlane.f32.xlu0 %v439
    %v452 = vpop.xlane.xlu0 %451
    %453 = vadd.xlane.f32.xlu0 %v440
    %v454 = vpop.xlane.xlu0 %453
    %v455 = vand.u32 2147483647, %v29
    %v456 = vand.u32 2147483647, %v30
    %v457 = vand.u32 2147483647, %v31
    %v458 = vand.u32 2147483647, %v32
    %v459 = vand.u32 2147483647, %v33
    %v460 = vand.u32 2147483647, %v34
    %v461 = vand.u32 2147483647, %v35
    %v462 = vlaneseq
    %v463 = vshrl.u32 %v462, 7
    %v464 = vsub.s32 0, %v463
    %v465 = vrot.slane %v74, %v464
    %v466 = vmul.f32 %v455, %v465
    %v467 = vmul.f32 %v456, %v465
    %v468 = vmul.f32 %v457, %v465
    %v469 = vmul.f32 %v458, %v465
    %v470 = vmul.f32 %v459, %v465
    %v471 = vmul.f32 %v460, %v465
    %v472 = vmul.f32 %v461, %v465
    %v473 = vsel %vm79, %v466, 0.0
    %474 = vadd.xlane.f32.xlu0 %v473
    %v475 = vpop.xlane.xlu0 %474
    %v476 = vsel %vm79, %v467, 0.0
    %477 = vadd.xlane.f32.xlu0 %v476
    %v478 = vpop.xlane.xlu0 %477
    %v479 = vsel %vm79, %v468, 0.0
    %480 = vadd.xlane.f32.xlu0 %v479
    %v481 = vpop.xlane.xlu0 %480
    %v482 = vsel %vm79, %v469, 0.0
    %483 = vadd.xlane.f32.xlu0 %v482
    %v484 = vpop.xlane.xlu0 %483
    %v485 = vsel %vm79, %v470, 0.0
    %486 = vadd.xlane.f32.xlu0 %v485
    %v487 = vpop.xlane.xlu0 %486
    %v488 = vsel %vm79, %v471, 0.0
    %489 = vadd.xlane.f32.xlu0 %v488
    %v490 = vpop.xlane.xlu0 %489
    %v491 = vsel %vm79, %v472, 0.0
    %492 = vadd.xlane.f32.xlu0 %v491
    %v493 = vpop.xlane.xlu0 %492
    %v494 = vadd.f32 %v442, %v475
    %v495 = vadd.f32 %v444, %v478
    %v496 = vadd.f32 %v446, %v481
    %v497 = vadd.f32 %v448, %v484
    %v498 = vadd.f32 %v450, %v487
    %v499 = vadd.f32 %v452, %v490
    %v500 = vadd.f32 %v454, %v493
    %v508 = vlaneseq
    %v509 = vand.u32 %v508, 127
    %v510 = vlaneseq
    %v511 = vshrl.u32 %v510, 7
    %v512 = vsub.s32 %v509, %v511
    %v513 = vrot.slane %v494, %v512
    %v514 = vadd.s32 %v509, 4294967288
    %v515 = vlaneseq
    %v516 = vshrl.u32 %v515, 7
    %v517 = vsub.s32 %v514, %v516
    %v518 = vrot.slane %v495, %v517
    %vm519 = vcmask 130112
    %v520 = vsel %vm519, %v518, %v513
    %v521 = vadd.s32 %v509, 4294967280
    %v522 = vlaneseq
    %v523 = vshrl.u32 %v522, 7
    %v524 = vsub.s32 %v521, %v523
    %v525 = vrot.slane %v496, %v524
    %vm526 = vcmask 195712
    %v527 = vsel %vm526, %v525, %v520
    %v528 = vadd.s32 %v509, 4294967272
    %v529 = vlaneseq
    %v530 = vshrl.u32 %v529, 7
    %v531 = vsub.s32 %v528, %v530
    %v532 = vrot.slane %v497, %v531
    %vm533 = vcmask 261312
    %v534 = vsel %vm533, %v532, %v527
    %v535 = vadd.s32 %v509, 4294967264
    %v536 = vlaneseq
    %v537 = vshrl.u32 %v536, 7
    %v538 = vsub.s32 %v535, %v537
    %v539 = vrot.slane %v498, %v538
    %vm540 = vcmask 326912
    %v541 = vsel %vm540, %v539, %v534
    %v542 = vadd.s32 %v509, 4294967256
    %v543 = vlaneseq
    %v544 = vshrl.u32 %v543, 7
    %v545 = vsub.s32 %v542, %v544
    %v546 = vrot.slane %v499, %v545
    %vm547 = vcmask 392512
    %v548 = vsel %vm547, %v546, %v541
    %v549 = vadd.s32 %v509, 4294967248
    %v550 = vlaneseq
    %v551 = vshrl.u32 %v550, 7
    %v552 = vsub.s32 %v549, %v551
    %v553 = vrot.slane %v500, %v552
    %vm554 = vcmask 458112
    %v555 = vsel %vm554, %v553, %v548
    %vm557 = vcmask 450560
    %558 = vst.msk [vmem:[#allocation5] sm:$0x1] %vm557, %v555
    // Predicated region
    $region18: #{tpu_custom_call.1} parent=1 // pred_check
      _
    $region19: #{tpu_custom_call.1} parent=1 // pred_check_branch
      %560 = sbr.rel (0) target = $region21
    $region20: #{tpu_custom_call.1} parent=1 // pred_region
      %s562 = ssub.s32 16, 16
      %563 = vsyncadd [#allocation4], %s562
      %s565 = sshll.u32 [#allocation5], 4
      %s566 = int_to_ptr.vmem [resolvable:$true] %s565
      %568 = dma.vmem_to_hbm [thread:$0]  %s566, 16, %s3, [#allocation4]
    $region21: #{tpu_custom_call.1} parent=1 // pred_fallthru
      _
    // Predicated region
    $region22: #{tpu_custom_call.1} parent=1 // pred_check
      _
    $region23: #{tpu_custom_call.1} parent=1 // pred_check_branch
      %570 = sbr.rel (0) target = $region25
    $region24: #{tpu_custom_call.1} parent=1 // pred_region
      %571 = dma.done [#allocation4], 16
    $region25: #{tpu_custom_call.1} parent=1 // pred_fallthru
      _
    %572 = vsyncpa [#allocation3], 1
    %573 = vsyncpa [#allocation4], 1

</llo_original>
